<compile_context>
chip_gen: v7x
topology: tpu7x:2x2x1
jax: 0.10.0
libtpu: 0.0.40
codegen_flags: <defaults>
</compile_context>

<pallas_src>
import functools

import jax
import jax.numpy as jnp
from jax.experimental import pallas as pl
from jax.experimental.pallas import tpu as pltpu

BN_EPS = 1e-5
LANE = 128
SUBLANE = 8


def _round_up(n, m):
    return ((n + m - 1) // m) * m


# ---------------------------------------------------------------------------
# Fused kernel: no grid, all params resident in VMEM, static block loop.
# ---------------------------------------------------------------------------
def fused_glow_kernel(x_ref, gamma_ref, beta_ref, w1_ref, b1_ref, w2_ref,
                      b2_ref, wout_ref, bout_ref, o_ref, *, num_blocks,
                      b_real):
    """Runs all GlowBlocks + the Linear(D->1) head in one invocation.

    x_ref:     [Bp, Dp]       (batch padded to a multiple of 8, zeros in pad)
    gamma/beta:[N, 1, Dp]
    w1_ref:    [N, Dp, Hp]    b1_ref: [N, 1, Hp]
    w2_ref:    [N, Hp, Dp]    b2_ref: [N, 1, Dp]
    wout_ref:  [1, Dp]        bout_ref: [1, 1] in SMEM (scalar)
    o_ref:     [Bp, 128]      lane-dense; head result broadcast across lanes
    """
    x = x_ref[...].astype(jnp.float32)                  # [Bp, Dp]
    bp = x.shape[0]
    inv_b = jnp.float32(1.0 / b_real)

    if b_real != bp:
        # Keep padded rows exactly zero between blocks so batch statistics
        # (sums over all Bp rows / b_real) stay correct.
        row_mask = (jax.lax.broadcasted_iota(jnp.int32, (bp, 1), 0)
                    < b_real).astype(jnp.float32)
    else:
        row_mask = None

    # Fully-unrolled static loop over blocks (num_blocks is a Python int).
    for i in range(num_blocks):
        # BatchNorm1d (training mode): batch mean / biased batch variance.
        mean = jnp.sum(x, axis=0, keepdims=True) * inv_b           # [1, Dp]
        mean_sq = jnp.sum(x * x, axis=0, keepdims=True) * inv_b    # [1, Dp]
        var = jnp.maximum(mean_sq - mean * mean, 0.0)
        scale = jax.lax.rsqrt(var + BN_EPS) * gamma_ref[i]         # [1, Dp]
        x_bn = (x - mean) * scale + beta_ref[i]

        # Linear1 + ReLU (MXU, f32 accumulate).
        h = jnp.dot(x_bn, w1_ref[i], preferred_element_type=jnp.float32)
        h = jnp.maximum(h + b1_ref[i], 0.0)

        # Linear2.
        z = jnp.dot(h, w2_ref[i], preferred_element_type=jnp.float32)
        z = z + b2_ref[i]

        if row_mask is not None:
            z = z * row_mask            # re-zero padded batch rows
        x = z

    # Output head: VPU row-reduction (avoids a 1-lane MXU matmul); write a
    # lane-dense [Bp, 128] slab with the result broadcast across lanes.
    y = jnp.sum(x * wout_ref[...], axis=-1, keepdims=True) + bout_ref[0, 0]
    o_ref[...] = jnp.broadcast_to(y, o_ref.shape).astype(o_ref.dtype)


# ---------------------------------------------------------------------------
# Wrapper: pad, stack, single pallas_call (no grid), slice head column.
# ---------------------------------------------------------------------------
def pack_params(block_params, out_params, input_dim, hidden_dim):
    """Zero-pad to lane-dense sizes and stack blocks along a leading axis.

    NOTE: correctness of the padded feature lanes depends on ALL padding being
    zeros (gamma padded with zeros -> padded columns get scale 0 through BN).
    """
    Dp = _round_up(input_dim, LANE)
    Hp = _round_up(hidden_dim, LANE)

    def pad2(a, rows, cols):
        out = jnp.pad(a, ((0, rows - a.shape[0]), (0, cols - a.shape[1])))
        return out

    packed = dict(
        gamma=jnp.stack([pad2(p["gamma"], 1, Dp) for p in block_params]),
        beta=jnp.stack([pad2(p["beta"], 1, Dp) for p in block_params]),
        w1_t=jnp.stack([pad2(p["w1_t"], Dp, Hp) for p in block_params]),
        b1=jnp.stack([pad2(p["b1"], 1, Hp) for p in block_params]),
        w2_t=jnp.stack([pad2(p["w2_t"], Hp, Dp) for p in block_params]),
        b2=jnp.stack([pad2(p["b2"], 1, Dp) for p in block_params]),
        w_out=pad2(out_params["w_t"].T, 1, Dp),   # [1, Dp] row vector
        b_out=out_params["b"],                    # [1, 1] -> SMEM scalar
    )
    # Padding-is-zero invariant (see note above).
    assert packed["gamma"].shape == (len(block_params), 1, Dp)
    return packed


@jax.jit
def glow_model_forward(x, packed):
    B, D = x.shape
    N, _, Dp = packed["gamma"].shape
    Hp = packed["w1_t"].shape[2]
    Bp = _round_up(max(B, SUBLANE), SUBLANE)

    x_p = jnp.pad(x.astype(jnp.float32), ((0, Bp - B), (0, Dp - D)))

    kernel = functools.partial(fused_glow_kernel, num_blocks=N, b_real=B)

    vmem_spec = pl.BlockSpec(memory_space=pltpu.MemorySpace.VMEM)
    smem_spec = pl.BlockSpec(memory_space=pltpu.MemorySpace.SMEM)

    out = pl.pallas_call(
        kernel,
        out_shape=jax.ShapeDtypeStruct((Bp, LANE), jnp.float32),
        in_specs=[
            vmem_spec,   # x
            vmem_spec,   # gamma
            vmem_spec,   # beta
            vmem_spec,   # w1_t
            vmem_spec,   # b1
            vmem_spec,   # w2_t
            vmem_spec,   # b2
            vmem_spec,   # w_out
            smem_spec,   # b_out (scalar)
        ],
        out_specs=vmem_spec,
        compiler_params=pltpu.CompilerParams(
            vmem_limit_bytes=32 * 1024 * 1024),
    )(x_p, packed["gamma"], packed["beta"], packed["w1_t"], packed["b1"],
      packed["w2_t"], packed["b2"], packed["w_out"], packed["b_out"])

    return out[:B, :1]


# ---------------------------------------------------------------------------
# Parameter init (deterministic, PyTorch-style uniform(-1/sqrt(fan_in), ...))
# at LOGICAL sizes; padding/stacking happens in pack_params.
# ---------------------------------------------------------------------------
def init_glow_params(key, input_dim, hidden_dim, num_blocks):
    params = []
    for _ in range(num_blocks):
        key, k1, k2, k3, k4 = jax.random.split(key, 5)
        bound1 = 1.0 / jnp.sqrt(input_dim)
        bound2 = 1.0 / jnp.sqrt(hidden_dim)
        params.append(dict(
            gamma=jnp.ones((1, input_dim), jnp.float32),
            beta=jnp.zeros((1, input_dim), jnp.float32),
            # stored pre-transposed: [in, out]
            w1_t=jax.random.uniform(k1, (input_dim, hidden_dim), jnp.float32,
                                    -bound1, bound1),
            b1=jax.random.uniform(k2, (1, hidden_dim), jnp.float32,
                                  -bound1, bound1),
            w2_t=jax.random.uniform(k3, (hidden_dim, input_dim), jnp.float32,
                                    -bound2, bound2),
            b2=jax.random.uniform(k4, (1, input_dim), jnp.float32,
                                  -bound2, bound2),
        ))
    key, k5, k6 = jax.random.split(key, 3)
    bound_o = 1.0 / jnp.sqrt(input_dim)
    out_params = dict(
        w_t=jax.random.uniform(k5, (input_dim, 1), jnp.float32,
                               -bound_o, bound_o),
        b=jax.random.uniform(k6, (1, 1), jnp.float32, -bound_o, bound_o),
    )
    return params, out_params


# Pure-JAX reference (training-mode BN semantics) for sanity check.
def glow_model_ref(x, block_params, out_params):
    for p in block_params:
        mean = jnp.mean(x, axis=0, keepdims=True)
        var = jnp.mean((x - mean) ** 2, axis=0, keepdims=True)
        x_bn = (x - mean) / jnp.sqrt(var + BN_EPS) * p["gamma"] + p["beta"]
        h = jnp.maximum(x_bn @ p["w1_t"] + p["b1"], 0.0)
        x = h @ p["w2_t"] + p["b2"]
    return x @ out_params["w_t"] + out_params["b"]


if __name__ == "__main__":
    input_dim, hidden_dim, num_blocks = 32, 64, 3

    key = jax.random.PRNGKey(0)
    key, k_init = jax.random.split(key)
    block_params, out_params = init_glow_params(k_init, input_dim, hidden_dim,
                                                num_blocks)
    packed = pack_params(block_params, out_params, input_dim, hidden_dim)

    # Case 1: sublane-aligned batch (no row padding path).
    key, xkey = jax.random.split(key)
    x8 = jax.random.normal(xkey, (8, input_dim), jnp.float32)
    y8 = jax.block_until_ready(glow_model_forward(x8, packed))
    y8_ref = glow_model_ref(x8, block_params, out_params)
    assert y8.shape == (8, 1)
    assert jnp.allclose(y8, y8_ref, atol=1e-3, rtol=1e-3), "mismatch (B=8)"

    # Case 2: non-multiple-of-8 batch (exercises masked BN statistics).
    key, xkey = jax.random.split(key)
    x13 = jax.random.normal(xkey, (13, input_dim), jnp.float32)
    y13 = jax.block_until_ready(glow_model_forward(x13, packed))
    y13_ref = glow_model_ref(x13, block_params, out_params)
    assert y13.shape == (13, 1)
    assert jnp.allclose(y13, y13_ref, atol=1e-3, rtol=1e-3), "mismatch (B=13)"

    print("KERNEL_OK")
</pallas_src>

<mosaic_0001>
module attributes {stable_mosaic.version = 11 : i64} {
  func.func @fused_glow_kernel(%arg0: memref<8x128xf32, #tpu.memory_space<vmem>>, %arg1: memref<3x1x128xf32, #tpu.memory_space<vmem>>, %arg2: memref<3x1x128xf32, #tpu.memory_space<vmem>>, %arg3: memref<3x128x128xf32, #tpu.memory_space<vmem>>, %arg4: memref<3x1x128xf32, #tpu.memory_space<vmem>>, %arg5: memref<3x128x128xf32, #tpu.memory_space<vmem>>, %arg6: memref<3x1x128xf32, #tpu.memory_space<vmem>>, %arg7: memref<1x128xf32, #tpu.memory_space<vmem>>, %arg8: memref<1x1xf32, #tpu.memory_space<smem>>, %arg9: memref<8x128xf32, #tpu.memory_space<vmem>>) attributes {dimension_semantics = [], scalar_prefetch = 0 : i64, scratch_operands = 0 : i64, tpu.core_type = #tpu.core_type<tc>} {
    %c0 = arith.constant 0 : index
    %c0_0 = arith.constant 0 : index
    %0 = vector.load %arg0[%c0, %c0_0] : memref<8x128xf32, #tpu.memory_space<vmem>>, vector<8x128xf32>
    %cst = arith.constant dense<0.000000e+00> : vector<128xf32>
    %1 = vector.multi_reduction <add>, %0, %cst [0] : vector<8x128xf32> to vector<128xf32>
    %2 = vector.shape_cast %1 : vector<128xf32> to vector<1x128xf32>
    %cst_1 = arith.constant 1.250000e-01 : f32
    %3 = vector.broadcast %cst_1 : f32 to vector<1x128xf32>
    %4 = arith.mulf %2, %3 : vector<1x128xf32>
    %5 = arith.mulf %0, %0 : vector<8x128xf32>
    %cst_2 = arith.constant dense<0.000000e+00> : vector<128xf32>
    %6 = vector.multi_reduction <add>, %5, %cst_2 [0] : vector<8x128xf32> to vector<128xf32>
    %7 = vector.shape_cast %6 : vector<128xf32> to vector<1x128xf32>
    %cst_3 = arith.constant 1.250000e-01 : f32
    %8 = vector.broadcast %cst_3 : f32 to vector<1x128xf32>
    %9 = arith.mulf %7, %8 : vector<1x128xf32>
    %10 = arith.mulf %4, %4 : vector<1x128xf32>
    %11 = arith.subf %9, %10 : vector<1x128xf32>
    %cst_4 = arith.constant 0.000000e+00 : f32
    %12 = vector.broadcast %cst_4 : f32 to vector<1x128xf32>
    %13 = arith.maximumf %11, %12 : vector<1x128xf32>
    %cst_5 = arith.constant 9.99999974E-6 : f32
    %14 = vector.broadcast %cst_5 : f32 to vector<1x128xf32>
    %15 = arith.addf %13, %14 : vector<1x128xf32>
    %16 = math.rsqrt %15 : vector<1x128xf32>
    %c0_6 = arith.constant 0 : index
    %c0_7 = arith.constant 0 : index
    %c0_8 = arith.constant 0 : index
    %17 = vector.load %arg1[%c0_6, %c0_7, %c0_8] : memref<3x1x128xf32, #tpu.memory_space<vmem>>, vector<1x1x128xf32>
    %18 = vector.shape_cast %17 : vector<1x1x128xf32> to vector<1x128xf32>
    %19 = arith.mulf %16, %18 : vector<1x128xf32>
    %20 = vector.broadcast %4 : vector<1x128xf32> to vector<8x128xf32>
    %21 = arith.subf %0, %20 : vector<8x128xf32>
    %22 = vector.broadcast %19 : vector<1x128xf32> to vector<8x128xf32>
    %23 = arith.mulf %21, %22 : vector<8x128xf32>
    %c0_9 = arith.constant 0 : index
    %c0_10 = arith.constant 0 : index
    %c0_11 = arith.constant 0 : index
    %24 = vector.load %arg2[%c0_9, %c0_10, %c0_11] : memref<3x1x128xf32, #tpu.memory_space<vmem>>, vector<1x1x128xf32>
    %25 = vector.shape_cast %24 : vector<1x1x128xf32> to vector<1x128xf32>
    %26 = vector.broadcast %25 : vector<1x128xf32> to vector<8x128xf32>
    %27 = arith.addf %23, %26 : vector<8x128xf32>
    %c0_12 = arith.constant 0 : index
    %c0_13 = arith.constant 0 : index
    %c0_14 = arith.constant 0 : index
    %28 = vector.load %arg3[%c0_12, %c0_13, %c0_14] : memref<3x128x128xf32, #tpu.memory_space<vmem>>, vector<1x128x128xf32>
    %29 = vector.shape_cast %28 : vector<1x128x128xf32> to vector<128x128xf32>
    %cst_15 = arith.constant dense<0.000000e+00> : vector<8x128xf32>
    %30 = tpu.matmul %27, %29, %cst_15 {dimension_numbers = #tpu.dot_dimension_numbers<[1], [0], [0], [1], [0, 0, 1, 1], [], []>} : vector<8x128xf32>, vector<128x128xf32>, vector<8x128xf32> -> vector<8x128xf32>
    %c0_16 = arith.constant 0 : index
    %c0_17 = arith.constant 0 : index
    %c0_18 = arith.constant 0 : index
    %31 = vector.load %arg4[%c0_16, %c0_17, %c0_18] : memref<3x1x128xf32, #tpu.memory_space<vmem>>, vector<1x1x128xf32>
    %32 = vector.shape_cast %31 : vector<1x1x128xf32> to vector<1x128xf32>
    %33 = vector.broadcast %32 : vector<1x128xf32> to vector<8x128xf32>
    %34 = arith.addf %30, %33 : vector<8x128xf32>
    %cst_19 = arith.constant 0.000000e+00 : f32
    %35 = vector.broadcast %cst_19 : f32 to vector<8x128xf32>
    %36 = arith.maximumf %34, %35 : vector<8x128xf32>
    %c0_20 = arith.constant 0 : index
    %c0_21 = arith.constant 0 : index
    %c0_22 = arith.constant 0 : index
    %37 = vector.load %arg5[%c0_20, %c0_21, %c0_22] : memref<3x128x128xf32, #tpu.memory_space<vmem>>, vector<1x128x128xf32>
    %38 = vector.shape_cast %37 : vector<1x128x128xf32> to vector<128x128xf32>
    %cst_23 = arith.constant dense<0.000000e+00> : vector<8x128xf32>
    %39 = tpu.matmul %36, %38, %cst_23 {dimension_numbers = #tpu.dot_dimension_numbers<[1], [0], [0], [1], [0, 0, 1, 1], [], []>} : vector<8x128xf32>, vector<128x128xf32>, vector<8x128xf32> -> vector<8x128xf32>
    %c0_24 = arith.constant 0 : index
    %c0_25 = arith.constant 0 : index
    %c0_26 = arith.constant 0 : index
    %40 = vector.load %arg6[%c0_24, %c0_25, %c0_26] : memref<3x1x128xf32, #tpu.memory_space<vmem>>, vector<1x1x128xf32>
    %41 = vector.shape_cast %40 : vector<1x1x128xf32> to vector<1x128xf32>
    %42 = vector.broadcast %41 : vector<1x128xf32> to vector<8x128xf32>
    %43 = arith.addf %39, %42 : vector<8x128xf32>
    %cst_27 = arith.constant dense<0.000000e+00> : vector<128xf32>
    %44 = vector.multi_reduction <add>, %43, %cst_27 [0] : vector<8x128xf32> to vector<128xf32>
    %45 = vector.shape_cast %44 : vector<128xf32> to vector<1x128xf32>
    %cst_28 = arith.constant 1.250000e-01 : f32
    %46 = vector.broadcast %cst_28 : f32 to vector<1x128xf32>
    %47 = arith.mulf %45, %46 : vector<1x128xf32>
    %48 = arith.mulf %43, %43 : vector<8x128xf32>
    %cst_29 = arith.constant dense<0.000000e+00> : vector<128xf32>
    %49 = vector.multi_reduction <add>, %48, %cst_29 [0] : vector<8x128xf32> to vector<128xf32>
    %50 = vector.shape_cast %49 : vector<128xf32> to vector<1x128xf32>
    %cst_30 = arith.constant 1.250000e-01 : f32
    %51 = vector.broadcast %cst_30 : f32 to vector<1x128xf32>
    %52 = arith.mulf %50, %51 : vector<1x128xf32>
    %53 = arith.mulf %47, %47 : vector<1x128xf32>
    %54 = arith.subf %52, %53 : vector<1x128xf32>
    %cst_31 = arith.constant 0.000000e+00 : f32
    %55 = vector.broadcast %cst_31 : f32 to vector<1x128xf32>
    %56 = arith.maximumf %54, %55 : vector<1x128xf32>
    %cst_32 = arith.constant 9.99999974E-6 : f32
    %57 = vector.broadcast %cst_32 : f32 to vector<1x128xf32>
    %58 = arith.addf %56, %57 : vector<1x128xf32>
    %59 = math.rsqrt %58 : vector<1x128xf32>
    %c1 = arith.constant 1 : index
    %c0_33 = arith.constant 0 : index
    %c0_34 = arith.constant 0 : index
    %60 = vector.load %arg1[%c1, %c0_33, %c0_34] : memref<3x1x128xf32, #tpu.memory_space<vmem>>, vector<1x1x128xf32>
    %61 = vector.shape_cast %60 : vector<1x1x128xf32> to vector<1x128xf32>
    %62 = arith.mulf %59, %61 : vector<1x128xf32>
    %63 = vector.broadcast %47 : vector<1x128xf32> to vector<8x128xf32>
    %64 = arith.subf %43, %63 : vector<8x128xf32>
    %65 = vector.broadcast %62 : vector<1x128xf32> to vector<8x128xf32>
    %66 = arith.mulf %64, %65 : vector<8x128xf32>
    %c1_35 = arith.constant 1 : index
    %c0_36 = arith.constant 0 : index
    %c0_37 = arith.constant 0 : index
    %67 = vector.load %arg2[%c1_35, %c0_36, %c0_37] : memref<3x1x128xf32, #tpu.memory_space<vmem>>, vector<1x1x128xf32>
    %68 = vector.shape_cast %67 : vector<1x1x128xf32> to vector<1x128xf32>
    %69 = vector.broadcast %68 : vector<1x128xf32> to vector<8x128xf32>
    %70 = arith.addf %66, %69 : vector<8x128xf32>
    %c1_38 = arith.constant 1 : index
    %c0_39 = arith.constant 0 : index
    %c0_40 = arith.constant 0 : index
    %71 = vector.load %arg3[%c1_38, %c0_39, %c0_40] : memref<3x128x128xf32, #tpu.memory_space<vmem>>, vector<1x128x128xf32>
    %72 = vector.shape_cast %71 : vector<1x128x128xf32> to vector<128x128xf32>
    %cst_41 = arith.constant dense<0.000000e+00> : vector<8x128xf32>
    %73 = tpu.matmul %70, %72, %cst_41 {dimension_numbers = #tpu.dot_dimension_numbers<[1], [0], [0], [1], [0, 0, 1, 1], [], []>} : vector<8x128xf32>, vector<128x128xf32>, vector<8x128xf32> -> vector<8x128xf32>
    %c1_42 = arith.constant 1 : index
    %c0_43 = arith.constant 0 : index
    %c0_44 = arith.constant 0 : index
    %74 = vector.load %arg4[%c1_42, %c0_43, %c0_44] : memref<3x1x128xf32, #tpu.memory_space<vmem>>, vector<1x1x128xf32>
    %75 = vector.shape_cast %74 : vector<1x1x128xf32> to vector<1x128xf32>
    %76 = vector.broadcast %75 : vector<1x128xf32> to vector<8x128xf32>
    %77 = arith.addf %73, %76 : vector<8x128xf32>
    %cst_45 = arith.constant 0.000000e+00 : f32
    %78 = vector.broadcast %cst_45 : f32 to vector<8x128xf32>
    %79 = arith.maximumf %77, %78 : vector<8x128xf32>
    %c1_46 = arith.constant 1 : index
    %c0_47 = arith.constant 0 : index
    %c0_48 = arith.constant 0 : index
    %80 = vector.load %arg5[%c1_46, %c0_47, %c0_48] : memref<3x128x128xf32, #tpu.memory_space<vmem>>, vector<1x128x128xf32>
    %81 = vector.shape_cast %80 : vector<1x128x128xf32> to vector<128x128xf32>
    %cst_49 = arith.constant dense<0.000000e+00> : vector<8x128xf32>
    %82 = tpu.matmul %79, %81, %cst_49 {dimension_numbers = #tpu.dot_dimension_numbers<[1], [0], [0], [1], [0, 0, 1, 1], [], []>} : vector<8x128xf32>, vector<128x128xf32>, vector<8x128xf32> -> vector<8x128xf32>
    %c1_50 = arith.constant 1 : index
    %c0_51 = arith.constant 0 : index
    %c0_52 = arith.constant 0 : index
    %83 = vector.load %arg6[%c1_50, %c0_51, %c0_52] : memref<3x1x128xf32, #tpu.memory_space<vmem>>, vector<1x1x128xf32>
    %84 = vector.shape_cast %83 : vector<1x1x128xf32> to vector<1x128xf32>
    %85 = vector.broadcast %84 : vector<1x128xf32> to vector<8x128xf32>
    %86 = arith.addf %82, %85 : vector<8x128xf32>
    %cst_53 = arith.constant dense<0.000000e+00> : vector<128xf32>
    %87 = vector.multi_reduction <add>, %86, %cst_53 [0] : vector<8x128xf32> to vector<128xf32>
    %88 = vector.shape_cast %87 : vector<128xf32> to vector<1x128xf32>
    %cst_54 = arith.constant 1.250000e-01 : f32
    %89 = vector.broadcast %cst_54 : f32 to vector<1x128xf32>
    %90 = arith.mulf %88, %89 : vector<1x128xf32>
    %91 = arith.mulf %86, %86 : vector<8x128xf32>
    %cst_55 = arith.constant dense<0.000000e+00> : vector<128xf32>
    %92 = vector.multi_reduction <add>, %91, %cst_55 [0] : vector<8x128xf32> to vector<128xf32>
    %93 = vector.shape_cast %92 : vector<128xf32> to vector<1x128xf32>
    %cst_56 = arith.constant 1.250000e-01 : f32
    %94 = vector.broadcast %cst_56 : f32 to vector<1x128xf32>
    %95 = arith.mulf %93, %94 : vector<1x128xf32>
    %96 = arith.mulf %90, %90 : vector<1x128xf32>
    %97 = arith.subf %95, %96 : vector<1x128xf32>
    %cst_57 = arith.constant 0.000000e+00 : f32
    %98 = vector.broadcast %cst_57 : f32 to vector<1x128xf32>
    %99 = arith.maximumf %97, %98 : vector<1x128xf32>
    %cst_58 = arith.constant 9.99999974E-6 : f32
    %100 = vector.broadcast %cst_58 : f32 to vector<1x128xf32>
    %101 = arith.addf %99, %100 : vector<1x128xf32>
    %102 = math.rsqrt %101 : vector<1x128xf32>
    %c2 = arith.constant 2 : index
    %c0_59 = arith.constant 0 : index
    %c0_60 = arith.constant 0 : index
    %103 = vector.load %arg1[%c2, %c0_59, %c0_60] : memref<3x1x128xf32, #tpu.memory_space<vmem>>, vector<1x1x128xf32>
    %104 = vector.shape_cast %103 : vector<1x1x128xf32> to vector<1x128xf32>
    %105 = arith.mulf %102, %104 : vector<1x128xf32>
    %106 = vector.broadcast %90 : vector<1x128xf32> to vector<8x128xf32>
    %107 = arith.subf %86, %106 : vector<8x128xf32>
    %108 = vector.broadcast %105 : vector<1x128xf32> to vector<8x128xf32>
    %109 = arith.mulf %107, %108 : vector<8x128xf32>
    %c2_61 = arith.constant 2 : index
    %c0_62 = arith.constant 0 : index
    %c0_63 = arith.constant 0 : index
    %110 = vector.load %arg2[%c2_61, %c0_62, %c0_63] : memref<3x1x128xf32, #tpu.memory_space<vmem>>, vector<1x1x128xf32>
    %111 = vector.shape_cast %110 : vector<1x1x128xf32> to vector<1x128xf32>
    %112 = vector.broadcast %111 : vector<1x128xf32> to vector<8x128xf32>
    %113 = arith.addf %109, %112 : vector<8x128xf32>
    %c2_64 = arith.constant 2 : index
    %c0_65 = arith.constant 0 : index
    %c0_66 = arith.constant 0 : index
    %114 = vector.load %arg3[%c2_64, %c0_65, %c0_66] : memref<3x128x128xf32, #tpu.memory_space<vmem>>, vector<1x128x128xf32>
    %115 = vector.shape_cast %114 : vector<1x128x128xf32> to vector<128x128xf32>
    %cst_67 = arith.constant dense<0.000000e+00> : vector<8x128xf32>
    %116 = tpu.matmul %113, %115, %cst_67 {dimension_numbers = #tpu.dot_dimension_numbers<[1], [0], [0], [1], [0, 0, 1, 1], [], []>} : vector<8x128xf32>, vector<128x128xf32>, vector<8x128xf32> -> vector<8x128xf32>
    %c2_68 = arith.constant 2 : index
    %c0_69 = arith.constant 0 : index
    %c0_70 = arith.constant 0 : index
    %117 = vector.load %arg4[%c2_68, %c0_69, %c0_70] : memref<3x1x128xf32, #tpu.memory_space<vmem>>, vector<1x1x128xf32>
    %118 = vector.shape_cast %117 : vector<1x1x128xf32> to vector<1x128xf32>
    %119 = vector.broadcast %118 : vector<1x128xf32> to vector<8x128xf32>
    %120 = arith.addf %116, %119 : vector<8x128xf32>
    %cst_71 = arith.constant 0.000000e+00 : f32
    %121 = vector.broadcast %cst_71 : f32 to vector<8x128xf32>
    %122 = arith.maximumf %120, %121 : vector<8x128xf32>
    %c2_72 = arith.constant 2 : index
    %c0_73 = arith.constant 0 : index
    %c0_74 = arith.constant 0 : index
    %123 = vector.load %arg5[%c2_72, %c0_73, %c0_74] : memref<3x128x128xf32, #tpu.memory_space<vmem>>, vector<1x128x128xf32>
    %124 = vector.shape_cast %123 : vector<1x128x128xf32> to vector<128x128xf32>
    %cst_75 = arith.constant dense<0.000000e+00> : vector<8x128xf32>
    %125 = tpu.matmul %122, %124, %cst_75 {dimension_numbers = #tpu.dot_dimension_numbers<[1], [0], [0], [1], [0, 0, 1, 1], [], []>} : vector<8x128xf32>, vector<128x128xf32>, vector<8x128xf32> -> vector<8x128xf32>
    %c2_76 = arith.constant 2 : index
    %c0_77 = arith.constant 0 : index
    %c0_78 = arith.constant 0 : index
    %126 = vector.load %arg6[%c2_76, %c0_77, %c0_78] : memref<3x1x128xf32, #tpu.memory_space<vmem>>, vector<1x1x128xf32>
    %127 = vector.shape_cast %126 : vector<1x1x128xf32> to vector<1x128xf32>
    %128 = vector.broadcast %127 : vector<1x128xf32> to vector<8x128xf32>
    %129 = arith.addf %125, %128 : vector<8x128xf32>
    %c0_79 = arith.constant 0 : index
    %c0_80 = arith.constant 0 : index
    %130 = vector.load %arg7[%c0_79, %c0_80] : memref<1x128xf32, #tpu.memory_space<vmem>>, vector<1x128xf32>
    %131 = vector.broadcast %130 : vector<1x128xf32> to vector<8x128xf32>
    %132 = arith.mulf %129, %131 : vector<8x128xf32>
    %cst_81 = arith.constant dense<0.000000e+00> : vector<8xf32>
    %133 = vector.multi_reduction <add>, %132, %cst_81 [1] : vector<8x128xf32> to vector<8xf32>
    %134 = vector.shape_cast %133 : vector<8xf32> to vector<8x1xf32>
    %c0_82 = arith.constant 0 : index
    %c0_83 = arith.constant 0 : index
    %135 = memref.load %arg8[%c0_82, %c0_83] : memref<1x1xf32, #tpu.memory_space<smem>>
    %136 = vector.broadcast %135 : f32 to vector<8x1xf32>
    %137 = arith.addf %134, %136 : vector<8x1xf32>
    %138 = vector.shape_cast %137 : vector<8x1xf32> to vector<8x1xf32>
    %139 = vector.broadcast %138 : vector<8x1xf32> to vector<8x128xf32>
    %c0_84 = arith.constant 0 : index
    %c0_85 = arith.constant 0 : index
    %140 = vector.load %arg9[%c0_84, %c0_85] : memref<8x128xf32, #tpu.memory_space<vmem>>, vector<8x128xf32>
    tpu.vector_store %arg9[%c0_84, %c0_85], %139 {strides = array<i32>} : memref<8x128xf32, #tpu.memory_space<vmem>>, vector<8x128xf32>,
    return
  }
}

</mosaic_0001>

<llo_original>
// kernel: glow_model_forward.1
$region0: #{glow_model_forward.1}
  #allocation0 [shape = 'u32[]', space=smem, size = 0x4, offset = 0x4, fixed_abs, tag = 'smem constant byte address 0x4 - core index']
  #allocation1 [shape = 'u32[144,128]{1,0:T(1,128)}', space=vmem, size = 0x12000, scoped, tag = 'internal scratch']
  #allocation2 [shape = 'f32[1,1]{1,0:T(1,128)S(6)}', space=smem, size = 0x200, scoped, tag = 'scoped memory for glow_model_forward.1']
  %s0 = inlined_call_operand.vmem [shape: f32[8,128], index: 0, kind: input, shape index: {}]
  %s1 = inlined_call_operand.vmem [shape: f32[3,1,128], index: 1, kind: input, shape index: {}]
  %s2 = inlined_call_operand.vmem [shape: f32[3,1,128], index: 2, kind: input, shape index: {}]
  %s3 = inlined_call_operand.hbm [shape: f32[3,128,128], index: 3, kind: input, shape index: {}]
  %s4 = inlined_call_operand.vmem [shape: f32[3,1,128], index: 4, kind: input, shape index: {}]
  %s5 = inlined_call_operand.hbm [shape: f32[3,128,128], index: 5, kind: input, shape index: {}]
  %s6 = inlined_call_operand.vmem [shape: f32[3,1,128], index: 6, kind: input, shape index: {}]
  %s7 = inlined_call_operand.vmem [shape: f32[1,128], index: 7, kind: input, shape index: {}]
  %s8 = inlined_call_operand.<no memory space> [shape: f32[1,1], index: 8, kind: input, shape index: {}]
  %s9 = inlined_call_operand.vmem [shape: f32[8,128], index: 9, kind: output, shape index: {}]
  %s10 = sld [smem:[#allocation0]]
  $region54: #{glow_model_forward.1} parent=0
    _
  %s12 = ssub.s32 1, %s10
  %s13 = scalar_select 0, %s12, %s10
  %14 = sst [smem:[#allocation2]] %s8
  $region1: #{glow_model_forward.1} parent=0
    #allocation3 [shape = 'u8[196608]{0}', space=vmem, size = 0x30000, scoped, tag = 'input window, operand 3, single buffered']
    #allocation4 [shape = 's32[1]{0}', space=sflag, size = 0x4, scoped, tag = 'scoped memory for glow_model_forward.1']
    #allocation5 [shape = 'u8[196608]{0}', space=vmem, size = 0x30000, scoped, tag = 'input window, operand 5, single buffered']
    #allocation6 [shape = 's32[1]{0}', space=sflag, size = 0x4, scoped, tag = 'scoped memory for glow_model_forward.1']
    %15 = vsyncpa [#allocation4], 0
    %16 = vsyncpa [#allocation6], 0
    // Predicated region
    $region2: #{glow_model_forward.1} parent=1 // pred_check
      _
    $region3: #{glow_model_forward.1} parent=1 // pred_check_branch
      %18 = sbr.rel (0) target = $region5
    $region4: #{glow_model_forward.1} parent=1 // pred_region
      _
    $region5: #{glow_model_forward.1} parent=1 // pred_fallthru
      _
    // Predicated region
    $region6: #{glow_model_forward.1} parent=1 // pred_check
      _
    $region7: #{glow_model_forward.1} parent=1 // pred_check_branch
      %20 = sbr.rel (0) target = $region9
    $region8: #{glow_model_forward.1} parent=1 // pred_region
      _
    $region9: #{glow_model_forward.1} parent=1 // pred_fallthru
      _
    // Predicated region
    $region10: #{glow_model_forward.1} parent=1 // pred_check
      _
    $region11: #{glow_model_forward.1} parent=1 // pred_check_branch
      %22 = sbr.rel (0) target = $region13
    $region12: #{glow_model_forward.1} parent=1 // pred_region
      _
    $region13: #{glow_model_forward.1} parent=1 // pred_fallthru
      _
    // Predicated region
    $region14: #{glow_model_forward.1} parent=1 // pred_check
      _
    $region15: #{glow_model_forward.1} parent=1 // pred_check_branch
      %24 = sbr.rel (0) target = $region17
    $region16: #{glow_model_forward.1} parent=1 // pred_region
      %s26 = ssub.s32 6144, 6144
      %27 = vsyncadd [#allocation4], %s26
      %s28 = sshll.u32 [#allocation3], 4
      %s29 = int_to_ptr.vmem [resolvable:$true] %s28
      %34 = dma.hbm_to_vmem [thread:$0]  %s3, 6144, %s29, [#allocation4], 128, 128, 8
    $region17: #{glow_model_forward.1} parent=1 // pred_fallthru
      _
    // Predicated region
    $region18: #{glow_model_forward.1} parent=1 // pred_check
      _
    $region19: #{glow_model_forward.1} parent=1 // pred_check_branch
      %36 = sbr.rel (0) target = $region21
    $region20: #{glow_model_forward.1} parent=1 // pred_region
      _
    $region21: #{glow_model_forward.1} parent=1 // pred_fallthru
      _
    // Predicated region
    $region22: #{glow_model_forward.1} parent=1 // pred_check
      _
    $region23: #{glow_model_forward.1} parent=1 // pred_check_branch
      %38 = sbr.rel (0) target = $region25
    $region24: #{glow_model_forward.1} parent=1 // pred_region
      %s40 = ssub.s32 6144, 6144
      %41 = vsyncadd [#allocation6], %s40
      %s42 = sshll.u32 [#allocation5], 4
      %s43 = int_to_ptr.vmem [resolvable:$true] %s42
      %48 = dma.hbm_to_vmem [thread:$0]  %s5, 6144, %s43, [#allocation6], 128, 128, 8
    $region25: #{glow_model_forward.1} parent=1 // pred_fallthru
      _
    // Predicated region
    $region26: #{glow_model_forward.1} parent=1 // pred_check
      _
    $region27: #{glow_model_forward.1} parent=1 // pred_check_branch
      %50 = sbr.rel (0) target = $region29
    $region28: #{glow_model_forward.1} parent=1 // pred_region
      _
    $region29: #{glow_model_forward.1} parent=1 // pred_fallthru
      _
    // Predicated region
    $region30: #{glow_model_forward.1} parent=1 // pred_check
      _
    $region31: #{glow_model_forward.1} parent=1 // pred_check_branch
      %52 = sbr.rel (0) target = $region33
    $region32: #{glow_model_forward.1} parent=1 // pred_region
      _
    $region33: #{glow_model_forward.1} parent=1 // pred_fallthru
      _
    // Predicated region
    $region34: #{glow_model_forward.1} parent=1 // pred_check
      _
    $region35: #{glow_model_forward.1} parent=1 // pred_check_branch
      %54 = sbr.rel (0) target = $region37
    $region36: #{glow_model_forward.1} parent=1 // pred_region
      _
    $region37: #{glow_model_forward.1} parent=1 // pred_fallthru
      _
    // Predicated region
    $region38: #{glow_model_forward.1} parent=1 // pred_check
      _
    $region39: #{glow_model_forward.1} parent=1 // pred_check_branch
      %56 = sbr.rel (0) target = $region41
    $region40: #{glow_model_forward.1} parent=1 // pred_region
      %57 = dma.done [#allocation4], 6144
    $region41: #{glow_model_forward.1} parent=1 // pred_fallthru
      _
    // Predicated region
    $region42: #{glow_model_forward.1} parent=1 // pred_check
      _
    $region43: #{glow_model_forward.1} parent=1 // pred_check_branch
      %59 = sbr.rel (0) target = $region45
    $region44: #{glow_model_forward.1} parent=1 // pred_region
      %60 = dma.done [#allocation6], 6144
    $region45: #{glow_model_forward.1} parent=1 // pred_fallthru
      _
    %v61 = vld [vmem:[%s0] sm:$0xff]
    %v62 = vrot.slane %v61, 4
    %v63 = vadd.f32 %v61, %v62
    %v64 = vrot.slane %v63, 2
    %v65 = vadd.f32 %v63, %v64
    %v66 = vrot.slane %v65, 1
    %v67 = vadd.f32 %v65, %v66
    %v68 = vmul.f32 %v67, 0.125
    %v69 = vmul.f32 %v61, %v61
    %v70 = vrot.slane %v69, 4
    %v71 = vadd.f32 %v69, %v70
    %v72 = vrot.slane %v71, 2
    %v73 = vadd.f32 %v71, %v72
    %v74 = vrot.slane %v73, 1
    %v75 = vadd.f32 %v73, %v74
    %v76 = vmul.f32 %v75, 0.125
    %v77 = vmul.f32 %v68, %v68
    %v78 = vsub.f32 %v76, %v77
    %v79 = vmax.f32 %v78, 0.0
    %v80 = vadd.f32 %v79, 1e-05
    %v81 = vrsqrt.pop %v80
    %v82 = vld [vmem:[%s1] sm:$0x1]
    %v83 = vmul.f32 %v81, %v82
    %v84 = vsub.f32 %v61, %v68
    %v85 = vlaneseq
    %v86 = vshrl.u32 %v85, 7
    %v87 = vsub.s32 0, %v86
    %v88 = vrot.slane %v83, %v87
    %v89 = vmul.f32 %v84, %v88
    %v90 = vld [vmem:[%s2] sm:$0x1]
    %v92 = vlaneseq
    %v93 = vshrl.u32 %v92, 7
    %v94 = vsub.s32 0, %v93
    %v95 = vrot.slane %v90, %v94
    %v97 = vadd.f32 %v89, %v95
    %v98 = vld [vmem:[#allocation3] sm:$0xff]
    %v99 = vld [vmem:[#allocation3 + $0x8] sm:$0xff]
    %v100 = vld [vmem:[#allocation3 + $0x10] sm:$0xff]
    %v101 = vld [vmem:[#allocation3 + $0x18] sm:$0xff]
    %v102 = vld [vmem:[#allocation3 + $0x20] sm:$0xff]
    %v103 = vld [vmem:[#allocation3 + $0x28] sm:$0xff]
    %v104 = vld [vmem:[#allocation3 + $0x30] sm:$0xff]
    %v105 = vld [vmem:[#allocation3 + $0x38] sm:$0xff]
    %v106 = vld [vmem:[#allocation3 + $0x40] sm:$0xff]
    %v107 = vld [vmem:[#allocation3 + $0x48] sm:$0xff]
    %v108 = vld [vmem:[#allocation3 + $0x50] sm:$0xff]
    %v109 = vld [vmem:[#allocation3 + $0x58] sm:$0xff]
    %v110 = vld [vmem:[#allocation3 + $0x60] sm:$0xff]
    %v111 = vld [vmem:[#allocation3 + $0x68] sm:$0xff]
    %v112 = vld [vmem:[#allocation3 + $0x70] sm:$0xff]
    %v113 = vld [vmem:[#allocation3 + $0x78] sm:$0xff]
    %v114 = vld [vmem:[%s4] sm:$0x1]
    %v116 = vlaneseq
    %v117 = vshrl.u32 %v116, 7
    %v118 = vsub.s32 0, %v117
    %v119 = vrot.slane %v114, %v118
    %121 = vmatprep.subr.mxu0 0.0
    %122 = vmatpush1.msra.mxu0 %v98
    %123 = vmatprep.subr.mxu0 0.0
    %124 = vmatpush1.msra.mxu0 %v99
    %125 = vmatprep.subr.mxu0 0.0
    %126 = vmatpush1.msra.mxu0 %v100
    %127 = vmatprep.subr.mxu0 0.0
    %128 = vmatpush1.msra.mxu0 %v101
    %129 = vmatprep.subr.mxu0 0.0
    %130 = vmatpush1.msra.mxu0 %v102
    %131 = vmatprep.subr.mxu0 0.0
    %132 = vmatpush1.msra.mxu0 %v103
    %133 = vmatprep.subr.mxu0 0.0
    %134 = vmatpush1.msra.mxu0 %v104
    %135 = vmatprep.subr.mxu0 0.0
    %136 = vmatpush1.msra.mxu0 %v105
    %137 = vmatprep.subr.mxu0 0.0
    %138 = vmatpush1.msra.mxu0 %v106
    %139 = vmatprep.subr.mxu0 0.0
    %140 = vmatpush1.msra.mxu0 %v107
    %141 = vmatprep.subr.mxu0 0.0
    %142 = vmatpush1.msra.mxu0 %v108
    %143 = vmatprep.subr.mxu0 0.0
    %144 = vmatpush1.msra.mxu0 %v109
    %145 = vmatprep.subr.mxu0 0.0
    %146 = vmatpush1.msra.mxu0 %v110
    %147 = vmatprep.subr.mxu0 0.0
    %148 = vmatpush1.msra.mxu0 %v111
    %149 = vmatprep.subr.mxu0 0.0
    %150 = vmatpush1.msra.mxu0 %v112
    %151 = vmatprep.subr.mxu0 0.0
    %152 = vmatpush1.msra.mxu0 %v113
    %153 = vmatprep.subr.mxu0 0.0
    %154 = vmatpush1.msra.mxu0 0.0
    %155 = vmatprep.subr.mxu0 0.0
    %156 = vmatpush1.msra.mxu0 0.0
    %157 = vmatprep.subr.mxu0 0.0
    %158 = vmatpush1.msra.mxu0 0.0
    %159 = vmatprep.subr.mxu0 0.0
    %160 = vmatpush1.msra.mxu0 0.0
    %161 = vmatprep.subr.mxu0 0.0
    %162 = vmatpush1.msra.mxu0 0.0
    %163 = vmatprep.subr.mxu0 0.0
    %164 = vmatpush1.msra.mxu0 0.0
    %165 = vmatprep.subr.mxu0 0.0
    %166 = vmatpush1.msra.mxu0 0.0
    %167 = vmatprep.subr.mxu0 0.0
    %168 = vmatpush1.msra.mxu0 0.0
    %169 = vmatprep.subr.mxu0 0.0
    %170 = vmatpush1.msra.mxu0 0.0
    %171 = vmatprep.subr.mxu0 0.0
    %172 = vmatpush1.msra.mxu0 0.0
    %173 = vmatprep.subr.mxu0 0.0
    %174 = vmatpush1.msra.mxu0 0.0
    %175 = vmatprep.subr.mxu0 0.0
    %176 = vmatpush1.msra.mxu0 0.0
    %177 = vmatprep.subr.mxu0 0.0
    %178 = vmatpush1.msra.mxu0 0.0
    %179 = vmatprep.subr.mxu0 0.0
    %180 = vmatpush1.msra.mxu0 0.0
    %181 = vmatprep.subr.mxu0 0.0
    %182 = vmatpush1.msra.mxu0 0.0
    %183 = vmatprep.subr.mxu0 0.0
    %184 = vmatpush1.msra.mxu0 0.0
    %185 = vmatprep.mubr.f32.mxu0 0.0
    %186 = vmatmul.mubr.f32.gmra.mrb[0].mxu0 %v97
    %v187 = vpop.f32.mrb[0].mxu0
    %v188 = vadd.f32 %v119, %v187
    %v189 = vpop.f32.mrb[0].mxu0
    %190 = vdwg.mxu0
    %v191 = vmax.f32 %v188, 0.0
    %v192 = vld [vmem:[#allocation5] sm:$0xff]
    %v193 = vld [vmem:[#allocation5 + $0x8] sm:$0xff]
    %v194 = vld [vmem:[#allocation5 + $0x10] sm:$0xff]
    %v195 = vld [vmem:[#allocation5 + $0x18] sm:$0xff]
    %v196 = vld [vmem:[#allocation5 + $0x20] sm:$0xff]
    %v197 = vld [vmem:[#allocation5 + $0x28] sm:$0xff]
    %v198 = vld [vmem:[#allocation5 + $0x30] sm:$0xff]
    %v199 = vld [vmem:[#allocation5 + $0x38] sm:$0xff]
    %v200 = vld [vmem:[#allocation5 + $0x40] sm:$0xff]
    %v201 = vld [vmem:[#allocation5 + $0x48] sm:$0xff]
    %v202 = vld [vmem:[#allocation5 + $0x50] sm:$0xff]
    %v203 = vld [vmem:[#allocation5 + $0x58] sm:$0xff]
    %v204 = vld [vmem:[#allocation5 + $0x60] sm:$0xff]
    %v205 = vld [vmem:[#allocation5 + $0x68] sm:$0xff]
    %v206 = vld [vmem:[#allocation5 + $0x70] sm:$0xff]
    %v207 = vld [vmem:[#allocation5 + $0x78] sm:$0xff]
    %v208 = vld [vmem:[%s6] sm:$0x1]
    %v210 = vlaneseq
    %v211 = vshrl.u32 %v210, 7
    %v212 = vsub.s32 0, %v211
    %v213 = vrot.slane %v208, %v212
    %215 = vmatprep.subr.mxu0 0.0
    %216 = vmatpush1.msra.mxu0 %v192
    %217 = vmatprep.subr.mxu0 0.0
    %218 = vmatpush1.msra.mxu0 %v193
    %219 = vmatprep.subr.mxu0 0.0
    %220 = vmatpush1.msra.mxu0 %v194
    %221 = vmatprep.subr.mxu0 0.0
    %222 = vmatpush1.msra.mxu0 %v195
    %223 = vmatprep.subr.mxu0 0.0
    %224 = vmatpush1.msra.mxu0 %v196
    %225 = vmatprep.subr.mxu0 0.0
    %226 = vmatpush1.msra.mxu0 %v197
    %227 = vmatprep.subr.mxu0 0.0
    %228 = vmatpush1.msra.mxu0 %v198
    %229 = vmatprep.subr.mxu0 0.0
    %230 = vmatpush1.msra.mxu0 %v199
    %231 = vmatprep.subr.mxu0 0.0
    %232 = vmatpush1.msra.mxu0 %v200
    %233 = vmatprep.subr.mxu0 0.0
    %234 = vmatpush1.msra.mxu0 %v201
    %235 = vmatprep.subr.mxu0 0.0
    %236 = vmatpush1.msra.mxu0 %v202
    %237 = vmatprep.subr.mxu0 0.0
    %238 = vmatpush1.msra.mxu0 %v203
    %239 = vmatprep.subr.mxu0 0.0
    %240 = vmatpush1.msra.mxu0 %v204
    %241 = vmatprep.subr.mxu0 0.0
    %242 = vmatpush1.msra.mxu0 %v205
    %243 = vmatprep.subr.mxu0 0.0
    %244 = vmatpush1.msra.mxu0 %v206
    %245 = vmatprep.subr.mxu0 0.0
    %246 = vmatpush1.msra.mxu0 %v207
    %247 = vmatprep.subr.mxu0 0.0
    %248 = vmatpush1.msra.mxu0 0.0
    %249 = vmatprep.subr.mxu0 0.0
    %250 = vmatpush1.msra.mxu0 0.0
    %251 = vmatprep.subr.mxu0 0.0
    %252 = vmatpush1.msra.mxu0 0.0
    %253 = vmatprep.subr.mxu0 0.0
    %254 = vmatpush1.msra.mxu0 0.0
    %255 = vmatprep.subr.mxu0 0.0
    %256 = vmatpush1.msra.mxu0 0.0
    %257 = vmatprep.subr.mxu0 0.0
    %258 = vmatpush1.msra.mxu0 0.0
    %259 = vmatprep.subr.mxu0 0.0
    %260 = vmatpush1.msra.mxu0 0.0
    %261 = vmatprep.subr.mxu0 0.0
    %262 = vmatpush1.msra.mxu0 0.0
    %263 = vmatprep.subr.mxu0 0.0
    %264 = vmatpush1.msra.mxu0 0.0
    %265 = vmatprep.subr.mxu0 0.0
    %266 = vmatpush1.msra.mxu0 0.0
    %267 = vmatprep.subr.mxu0 0.0
    %268 = vmatpush1.msra.mxu0 0.0
    %269 = vmatprep.subr.mxu0 0.0
    %270 = vmatpush1.msra.mxu0 0.0
    %271 = vmatprep.subr.mxu0 0.0
    %272 = vmatpush1.msra.mxu0 0.0
    %273 = vmatprep.subr.mxu0 0.0
    %274 = vmatpush1.msra.mxu0 0.0
    %275 = vmatprep.subr.mxu0 0.0
    %276 = vmatpush1.msra.mxu0 0.0
    %277 = vmatprep.subr.mxu0 0.0
    %278 = vmatpush1.msra.mxu0 0.0
    %279 = vmatprep.mubr.f32.mxu0 0.0
    %280 = vmatmul.mubr.f32.gmra.mrb[0].mxu0 %v191
    %v281 = vpop.f32.mrb[0].mxu0
    %v282 = vadd.f32 %v213, %v281
    %v283 = vpop.f32.mrb[0].mxu0
    %284 = vdwg.mxu0
    %v285 = vrot.slane %v282, 4
    %v286 = vadd.f32 %v282, %v285
    %v287 = vrot.slane %v286, 2
    %v288 = vadd.f32 %v286, %v287
    %v289 = vrot.slane %v288, 1
    %v290 = vadd.f32 %v288, %v289
    %v291 = vmul.f32 %v290, 0.125
    %v292 = vmul.f32 %v282, %v282
    %v293 = vrot.slane %v292, 4
    %v294 = vadd.f32 %v292, %v293
    %v295 = vrot.slane %v294, 2
    %v296 = vadd.f32 %v294, %v295
    %v297 = vrot.slane %v296, 1
    %v298 = vadd.f32 %v296, %v297
    %v299 = vmul.f32 %v298, 0.125
    %v300 = vmul.f32 %v291, %v291
    %v301 = vsub.f32 %v299, %v300
    %v302 = vmax.f32 %v301, 0.0
    %v303 = vadd.f32 %v302, 1e-05
    %v304 = vrsqrt.pop %v303
    %s305 = scalar_lea.vmem %s1, 1
    %v306 = vld [vmem:[%s305] sm:$0x1]
    %v307 = vmul.f32 %v304, %v306
    %v308 = vsub.f32 %v282, %v291
    %v309 = vlaneseq
    %v310 = vshrl.u32 %v309, 7
    %v311 = vsub.s32 0, %v310
    %v312 = vrot.slane %v307, %v311
    %v313 = vmul.f32 %v308, %v312
    %s314 = scalar_lea.vmem %s2, 1
    %v315 = vld [vmem:[%s314] sm:$0x1]
    %v317 = vlaneseq
    %v318 = vshrl.u32 %v317, 7
    %v319 = vsub.s32 0, %v318
    %v320 = vrot.slane %v315, %v319
    %v322 = vadd.f32 %v313, %v320
    %s323 = scalar_lea.vmem [#allocation3], 128
    %v324 = vld [vmem:[%s323] sm:$0xff]
    %v325 = vld [vmem:[%s323 + $0x8] sm:$0xff]
    %v326 = vld [vmem:[%s323 + $0x10] sm:$0xff]
    %v327 = vld [vmem:[%s323 + $0x18] sm:$0xff]
    %v328 = vld [vmem:[%s323 + $0x20] sm:$0xff]
    %v329 = vld [vmem:[%s323 + $0x28] sm:$0xff]
    %v330 = vld [vmem:[%s323 + $0x30] sm:$0xff]
    %v331 = vld [vmem:[%s323 + $0x38] sm:$0xff]
    %v332 = vld [vmem:[%s323 + $0x40] sm:$0xff]
    %v333 = vld [vmem:[%s323 + $0x48] sm:$0xff]
    %v334 = vld [vmem:[%s323 + $0x50] sm:$0xff]
    %v335 = vld [vmem:[%s323 + $0x58] sm:$0xff]
    %v336 = vld [vmem:[%s323 + $0x60] sm:$0xff]
    %v337 = vld [vmem:[%s323 + $0x68] sm:$0xff]
    %v338 = vld [vmem:[%s323 + $0x70] sm:$0xff]
    %v339 = vld [vmem:[%s323 + $0x78] sm:$0xff]
    %s340 = scalar_lea.vmem %s4, 1
    %v341 = vld [vmem:[%s340] sm:$0x1]
    %v343 = vlaneseq
    %v344 = vshrl.u32 %v343, 7
    %v345 = vsub.s32 0, %v344
    %v346 = vrot.slane %v341, %v345
    %348 = vmatprep.subr.mxu0 0.0
    %349 = vmatpush1.msra.mxu0 %v324
    %350 = vmatprep.subr.mxu0 0.0
    %351 = vmatpush1.msra.mxu0 %v325
    %352 = vmatprep.subr.mxu0 0.0
    %353 = vmatpush1.msra.mxu0 %v326
    %354 = vmatprep.subr.mxu0 0.0
    %355 = vmatpush1.msra.mxu0 %v327
    %356 = vmatprep.subr.mxu0 0.0
    %357 = vmatpush1.msra.mxu0 %v328
    %358 = vmatprep.subr.mxu0 0.0
    %359 = vmatpush1.msra.mxu0 %v329
    %360 = vmatprep.subr.mxu0 0.0
    %361 = vmatpush1.msra.mxu0 %v330
    %362 = vmatprep.subr.mxu0 0.0
    %363 = vmatpush1.msra.mxu0 %v331
    %364 = vmatprep.subr.mxu0 0.0
    %365 = vmatpush1.msra.mxu0 %v332
    %366 = vmatprep.subr.mxu0 0.0
    %367 = vmatpush1.msra.mxu0 %v333
    %368 = vmatprep.subr.mxu0 0.0
    %369 = vmatpush1.msra.mxu0 %v334
    %370 = vmatprep.subr.mxu0 0.0
    %371 = vmatpush1.msra.mxu0 %v335
    %372 = vmatprep.subr.mxu0 0.0
    %373 = vmatpush1.msra.mxu0 %v336
    %374 = vmatprep.subr.mxu0 0.0
    %375 = vmatpush1.msra.mxu0 %v337
    %376 = vmatprep.subr.mxu0 0.0
    %377 = vmatpush1.msra.mxu0 %v338
    %378 = vmatprep.subr.mxu0 0.0
    %379 = vmatpush1.msra.mxu0 %v339
    %380 = vmatprep.subr.mxu0 0.0
    %381 = vmatpush1.msra.mxu0 0.0
    %382 = vmatprep.subr.mxu0 0.0
    %383 = vmatpush1.msra.mxu0 0.0
    %384 = vmatprep.subr.mxu0 0.0
    %385 = vmatpush1.msra.mxu0 0.0
    %386 = vmatprep.subr.mxu0 0.0
    %387 = vmatpush1.msra.mxu0 0.0
    %388 = vmatprep.subr.mxu0 0.0
    %389 = vmatpush1.msra.mxu0 0.0
    %390 = vmatprep.subr.mxu0 0.0
    %391 = vmatpush1.msra.mxu0 0.0
    %392 = vmatprep.subr.mxu0 0.0
    %393 = vmatpush1.msra.mxu0 0.0
    %394 = vmatprep.subr.mxu0 0.0
    %395 = vmatpush1.msra.mxu0 0.0
    %396 = vmatprep.subr.mxu0 0.0
    %397 = vmatpush1.msra.mxu0 0.0
    %398 = vmatprep.subr.mxu0 0.0
    %399 = vmatpush1.msra.mxu0 0.0
    %400 = vmatprep.subr.mxu0 0.0
    %401 = vmatpush1.msra.mxu0 0.0
    %402 = vmatprep.subr.mxu0 0.0
    %403 = vmatpush1.msra.mxu0 0.0
    %404 = vmatprep.subr.mxu0 0.0
    %405 = vmatpush1.msra.mxu0 0.0
    %406 = vmatprep.subr.mxu0 0.0
    %407 = vmatpush1.msra.mxu0 0.0
    %408 = vmatprep.subr.mxu0 0.0
    %409 = vmatpush1.msra.mxu0 0.0
    %410 = vmatprep.subr.mxu0 0.0
    %411 = vmatpush1.msra.mxu0 0.0
    %412 = vmatprep.mubr.f32.mxu0 0.0
    %413 = vmatmul.mubr.f32.gmra.mrb[0].mxu0 %v322
    %v414 = vpop.f32.mrb[0].mxu0
    %v415 = vadd.f32 %v346, %v414
    %v416 = vpop.f32.mrb[0].mxu0
    %417 = vdwg.mxu0
    %v418 = vmax.f32 %v415, 0.0
    %s419 = scalar_lea.vmem [#allocation5], 128
    %v420 = vld [vmem:[%s419] sm:$0xff]
    %v421 = vld [vmem:[%s419 + $0x8] sm:$0xff]
    %v422 = vld [vmem:[%s419 + $0x10] sm:$0xff]
    %v423 = vld [vmem:[%s419 + $0x18] sm:$0xff]
    %v424 = vld [vmem:[%s419 + $0x20] sm:$0xff]
    %v425 = vld [vmem:[%s419 + $0x28] sm:$0xff]
    %v426 = vld [vmem:[%s419 + $0x30] sm:$0xff]
    %v427 = vld [vmem:[%s419 + $0x38] sm:$0xff]
    %v428 = vld [vmem:[%s419 + $0x40] sm:$0xff]
    %v429 = vld [vmem:[%s419 + $0x48] sm:$0xff]
    %v430 = vld [vmem:[%s419 + $0x50] sm:$0xff]
    %v431 = vld [vmem:[%s419 + $0x58] sm:$0xff]
    %v432 = vld [vmem:[%s419 + $0x60] sm:$0xff]
    %v433 = vld [vmem:[%s419 + $0x68] sm:$0xff]
    %v434 = vld [vmem:[%s419 + $0x70] sm:$0xff]
    %v435 = vld [vmem:[%s419 + $0x78] sm:$0xff]
    %s436 = scalar_lea.vmem %s6, 1
    %v437 = vld [vmem:[%s436] sm:$0x1]
    %v439 = vlaneseq
    %v440 = vshrl.u32 %v439, 7
    %v441 = vsub.s32 0, %v440
    %v442 = vrot.slane %v437, %v441
    %444 = vmatprep.subr.mxu0 0.0
    %445 = vmatpush1.msra.mxu0 %v420
    %446 = vmatprep.subr.mxu0 0.0
    %447 = vmatpush1.msra.mxu0 %v421
    %448 = vmatprep.subr.mxu0 0.0
    %449 = vmatpush1.msra.mxu0 %v422
    %450 = vmatprep.subr.mxu0 0.0
    %451 = vmatpush1.msra.mxu0 %v423
    %452 = vmatprep.subr.mxu0 0.0
    %453 = vmatpush1.msra.mxu0 %v424
    %454 = vmatprep.subr.mxu0 0.0
    %455 = vmatpush1.msra.mxu0 %v425
    %456 = vmatprep.subr.mxu0 0.0
    %457 = vmatpush1.msra.mxu0 %v426
    %458 = vmatprep.subr.mxu0 0.0
    %459 = vmatpush1.msra.mxu0 %v427
    %460 = vmatprep.subr.mxu0 0.0
    %461 = vmatpush1.msra.mxu0 %v428
    %462 = vmatprep.subr.mxu0 0.0
    %463 = vmatpush1.msra.mxu0 %v429
    %464 = vmatprep.subr.mxu0 0.0
    %465 = vmatpush1.msra.mxu0 %v430
    %466 = vmatprep.subr.mxu0 0.0
    %467 = vmatpush1.msra.mxu0 %v431
    %468 = vmatprep.subr.mxu0 0.0
    %469 = vmatpush1.msra.mxu0 %v432
    %470 = vmatprep.subr.mxu0 0.0
    %471 = vmatpush1.msra.mxu0 %v433
    %472 = vmatprep.subr.mxu0 0.0
    %473 = vmatpush1.msra.mxu0 %v434
    %474 = vmatprep.subr.mxu0 0.0
    %475 = vmatpush1.msra.mxu0 %v435
    %476 = vmatprep.subr.mxu0 0.0
    %477 = vmatpush1.msra.mxu0 0.0
    %478 = vmatprep.subr.mxu0 0.0
    %479 = vmatpush1.msra.mxu0 0.0
    %480 = vmatprep.subr.mxu0 0.0
    %481 = vmatpush1.msra.mxu0 0.0
    %482 = vmatprep.subr.mxu0 0.0
    %483 = vmatpush1.msra.mxu0 0.0
    %484 = vmatprep.subr.mxu0 0.0
    %485 = vmatpush1.msra.mxu0 0.0
    %486 = vmatprep.subr.mxu0 0.0
    %487 = vmatpush1.msra.mxu0 0.0
    %488 = vmatprep.subr.mxu0 0.0
    %489 = vmatpush1.msra.mxu0 0.0
    %490 = vmatprep.subr.mxu0 0.0
    %491 = vmatpush1.msra.mxu0 0.0
    %492 = vmatprep.subr.mxu0 0.0
    %493 = vmatpush1.msra.mxu0 0.0
    %494 = vmatprep.subr.mxu0 0.0
    %495 = vmatpush1.msra.mxu0 0.0
    %496 = vmatprep.subr.mxu0 0.0
    %497 = vmatpush1.msra.mxu0 0.0
    %498 = vmatprep.subr.mxu0 0.0
    %499 = vmatpush1.msra.mxu0 0.0
    %500 = vmatprep.subr.mxu0 0.0
    %501 = vmatpush1.msra.mxu0 0.0
    %502 = vmatprep.subr.mxu0 0.0
    %503 = vmatpush1.msra.mxu0 0.0
    %504 = vmatprep.subr.mxu0 0.0
    %505 = vmatpush1.msra.mxu0 0.0
    %506 = vmatprep.subr.mxu0 0.0
    %507 = vmatpush1.msra.mxu0 0.0
    %508 = vmatprep.mubr.f32.mxu0 0.0
    %509 = vmatmul.mubr.f32.gmra.mrb[0].mxu0 %v418
    %v510 = vpop.f32.mrb[0].mxu0
    %v511 = vadd.f32 %v442, %v510
    %v512 = vpop.f32.mrb[0].mxu0
    %513 = vdwg.mxu0
    %v514 = vrot.slane %v511, 4
    %v515 = vadd.f32 %v511, %v514
    %v516 = vrot.slane %v515, 2
    %v517 = vadd.f32 %v515, %v516
    %v518 = vrot.slane %v517, 1
    %v519 = vadd.f32 %v517, %v518
    %v520 = vmul.f32 %v519, 0.125
    %v521 = vmul.f32 %v511, %v511
    %v522 = vrot.slane %v521, 4
    %v523 = vadd.f32 %v521, %v522
    %v524 = vrot.slane %v523, 2
    %v525 = vadd.f32 %v523, %v524
    %v526 = vrot.slane %v525, 1
    %v527 = vadd.f32 %v525, %v526
    %v528 = vmul.f32 %v527, 0.125
    %v529 = vmul.f32 %v520, %v520
    %v530 = vsub.f32 %v528, %v529
    %v531 = vmax.f32 %v530, 0.0
    %v532 = vadd.f32 %v531, 1e-05
    %v533 = vrsqrt.pop %v532
    %s534 = scalar_lea.vmem %s1, 2
    %v535 = vld [vmem:[%s534] sm:$0x1]
    %v536 = vmul.f32 %v533, %v535
    %v537 = vsub.f32 %v511, %v520
    %v538 = vlaneseq
    %v539 = vshrl.u32 %v538, 7
    %v540 = vsub.s32 0, %v539
    %v541 = vrot.slane %v536, %v540
    %v542 = vmul.f32 %v537, %v541
    %s543 = scalar_lea.vmem %s2, 2
    %v544 = vld [vmem:[%s543] sm:$0x1]
    %v546 = vlaneseq
    %v547 = vshrl.u32 %v546, 7
    %v548 = vsub.s32 0, %v547
    %v549 = vrot.slane %v544, %v548
    %v551 = vadd.f32 %v542, %v549
    %s552 = scalar_lea.vmem [#allocation3], 256
    %v553 = vld [vmem:[%s552] sm:$0xff]
    %v554 = vld [vmem:[%s552 + $0x8] sm:$0xff]
    %v555 = vld [vmem:[%s552 + $0x10] sm:$0xff]
    %v556 = vld [vmem:[%s552 + $0x18] sm:$0xff]
    %v557 = vld [vmem:[%s552 + $0x20] sm:$0xff]
    %v558 = vld [vmem:[%s552 + $0x28] sm:$0xff]
    %v559 = vld [vmem:[%s552 + $0x30] sm:$0xff]
    %v560 = vld [vmem:[%s552 + $0x38] sm:$0xff]
    %v561 = vld [vmem:[%s552 + $0x40] sm:$0xff]
    %v562 = vld [vmem:[%s552 + $0x48] sm:$0xff]
    %v563 = vld [vmem:[%s552 + $0x50] sm:$0xff]
    %v564 = vld [vmem:[%s552 + $0x58] sm:$0xff]
    %v565 = vld [vmem:[%s552 + $0x60] sm:$0xff]
    %v566 = vld [vmem:[%s552 + $0x68] sm:$0xff]
    %v567 = vld [vmem:[%s552 + $0x70] sm:$0xff]
    %v568 = vld [vmem:[%s552 + $0x78] sm:$0xff]
    %s569 = scalar_lea.vmem %s4, 2
    %v570 = vld [vmem:[%s569] sm:$0x1]
    %v572 = vlaneseq
    %v573 = vshrl.u32 %v572, 7
    %v574 = vsub.s32 0, %v573
    %v575 = vrot.slane %v570, %v574
    %577 = vmatprep.subr.mxu0 0.0
    %578 = vmatpush1.msra.mxu0 %v553
    %579 = vmatprep.subr.mxu0 0.0
    %580 = vmatpush1.msra.mxu0 %v554
    %581 = vmatprep.subr.mxu0 0.0
    %582 = vmatpush1.msra.mxu0 %v555
    %583 = vmatprep.subr.mxu0 0.0
    %584 = vmatpush1.msra.mxu0 %v556
    %585 = vmatprep.subr.mxu0 0.0
    %586 = vmatpush1.msra.mxu0 %v557
    %587 = vmatprep.subr.mxu0 0.0
    %588 = vmatpush1.msra.mxu0 %v558
    %589 = vmatprep.subr.mxu0 0.0
    %590 = vmatpush1.msra.mxu0 %v559
    %591 = vmatprep.subr.mxu0 0.0
    %592 = vmatpush1.msra.mxu0 %v560
    %593 = vmatprep.subr.mxu0 0.0
    %594 = vmatpush1.msra.mxu0 %v561
    %595 = vmatprep.subr.mxu0 0.0
    %596 = vmatpush1.msra.mxu0 %v562
    %597 = vmatprep.subr.mxu0 0.0
    %598 = vmatpush1.msra.mxu0 %v563
    %599 = vmatprep.subr.mxu0 0.0
    %600 = vmatpush1.msra.mxu0 %v564
    %601 = vmatprep.subr.mxu0 0.0
    %602 = vmatpush1.msra.mxu0 %v565
    %603 = vmatprep.subr.mxu0 0.0
    %604 = vmatpush1.msra.mxu0 %v566
    %605 = vmatprep.subr.mxu0 0.0
    %606 = vmatpush1.msra.mxu0 %v567
    %607 = vmatprep.subr.mxu0 0.0
    %608 = vmatpush1.msra.mxu0 %v568
    %609 = vmatprep.subr.mxu0 0.0
    %610 = vmatpush1.msra.mxu0 0.0
    %611 = vmatprep.subr.mxu0 0.0
    %612 = vmatpush1.msra.mxu0 0.0
    %613 = vmatprep.subr.mxu0 0.0
    %614 = vmatpush1.msra.mxu0 0.0
    %615 = vmatprep.subr.mxu0 0.0
    %616 = vmatpush1.msra.mxu0 0.0
    %617 = vmatprep.subr.mxu0 0.0
    %618 = vmatpush1.msra.mxu0 0.0
    %619 = vmatprep.subr.mxu0 0.0
    %620 = vmatpush1.msra.mxu0 0.0
    %621 = vmatprep.subr.mxu0 0.0
    %622 = vmatpush1.msra.mxu0 0.0
    %623 = vmatprep.subr.mxu0 0.0
    %624 = vmatpush1.msra.mxu0 0.0
    %625 = vmatprep.subr.mxu0 0.0
    %626 = vmatpush1.msra.mxu0 0.0
    %627 = vmatprep.subr.mxu0 0.0
    %628 = vmatpush1.msra.mxu0 0.0
    %629 = vmatprep.subr.mxu0 0.0
    %630 = vmatpush1.msra.mxu0 0.0
    %631 = vmatprep.subr.mxu0 0.0
    %632 = vmatpush1.msra.mxu0 0.0
    %633 = vmatprep.subr.mxu0 0.0
    %634 = vmatpush1.msra.mxu0 0.0
    %635 = vmatprep.subr.mxu0 0.0
    %636 = vmatpush1.msra.mxu0 0.0
    %637 = vmatprep.subr.mxu0 0.0
    %638 = vmatpush1.msra.mxu0 0.0
    %639 = vmatprep.subr.mxu0 0.0
    %640 = vmatpush1.msra.mxu0 0.0
    %641 = vmatprep.mubr.f32.mxu0 0.0
    %642 = vmatmul.mubr.f32.gmra.mrb[0].mxu0 %v551
    %v643 = vpop.f32.mrb[0].mxu0
    %v644 = vadd.f32 %v575, %v643
    %v645 = vpop.f32.mrb[0].mxu0
    %646 = vdwg.mxu0
    %v647 = vmax.f32 %v644, 0.0
    %s648 = scalar_lea.vmem [#allocation5], 256
    %v649 = vld [vmem:[%s648] sm:$0xff]
    %v650 = vld [vmem:[%s648 + $0x8] sm:$0xff]
    %v651 = vld [vmem:[%s648 + $0x10] sm:$0xff]
    %v652 = vld [vmem:[%s648 + $0x18] sm:$0xff]
    %v653 = vld [vmem:[%s648 + $0x20] sm:$0xff]
    %v654 = vld [vmem:[%s648 + $0x28] sm:$0xff]
    %v655 = vld [vmem:[%s648 + $0x30] sm:$0xff]
    %v656 = vld [vmem:[%s648 + $0x38] sm:$0xff]
    %v657 = vld [vmem:[%s648 + $0x40] sm:$0xff]
    %v658 = vld [vmem:[%s648 + $0x48] sm:$0xff]
    %v659 = vld [vmem:[%s648 + $0x50] sm:$0xff]
    %v660 = vld [vmem:[%s648 + $0x58] sm:$0xff]
    %v661 = vld [vmem:[%s648 + $0x60] sm:$0xff]
    %v662 = vld [vmem:[%s648 + $0x68] sm:$0xff]
    %v663 = vld [vmem:[%s648 + $0x70] sm:$0xff]
    %v664 = vld [vmem:[%s648 + $0x78] sm:$0xff]
    %s665 = scalar_lea.vmem %s6, 2
    %v666 = vld [vmem:[%s665] sm:$0x1]
    %v668 = vlaneseq
    %v669 = vshrl.u32 %v668, 7
    %v670 = vsub.s32 0, %v669
    %v671 = vrot.slane %v666, %v670
    %673 = vmatprep.subr.mxu0 0.0
    %674 = vmatpush1.msra.mxu0 %v649
    %675 = vmatprep.subr.mxu0 0.0
    %676 = vmatpush1.msra.mxu0 %v650
    %677 = vmatprep.subr.mxu0 0.0
    %678 = vmatpush1.msra.mxu0 %v651
    %679 = vmatprep.subr.mxu0 0.0
    %680 = vmatpush1.msra.mxu0 %v652
    %681 = vmatprep.subr.mxu0 0.0
    %682 = vmatpush1.msra.mxu0 %v653
    %683 = vmatprep.subr.mxu0 0.0
    %684 = vmatpush1.msra.mxu0 %v654
    %685 = vmatprep.subr.mxu0 0.0
    %686 = vmatpush1.msra.mxu0 %v655
    %687 = vmatprep.subr.mxu0 0.0
    %688 = vmatpush1.msra.mxu0 %v656
    %689 = vmatprep.subr.mxu0 0.0
    %690 = vmatpush1.msra.mxu0 %v657
    %691 = vmatprep.subr.mxu0 0.0
    %692 = vmatpush1.msra.mxu0 %v658
    %693 = vmatprep.subr.mxu0 0.0
    %694 = vmatpush1.msra.mxu0 %v659
    %695 = vmatprep.subr.mxu0 0.0
    %696 = vmatpush1.msra.mxu0 %v660
    %697 = vmatprep.subr.mxu0 0.0
    %698 = vmatpush1.msra.mxu0 %v661
    %699 = vmatprep.subr.mxu0 0.0
    %700 = vmatpush1.msra.mxu0 %v662
    %701 = vmatprep.subr.mxu0 0.0
    %702 = vmatpush1.msra.mxu0 %v663
    %703 = vmatprep.subr.mxu0 0.0
    %704 = vmatpush1.msra.mxu0 %v664
    %705 = vmatprep.subr.mxu0 0.0
    %706 = vmatpush1.msra.mxu0 0.0
    %707 = vmatprep.subr.mxu0 0.0
    %708 = vmatpush1.msra.mxu0 0.0
    %709 = vmatprep.subr.mxu0 0.0
    %710 = vmatpush1.msra.mxu0 0.0
    %711 = vmatprep.subr.mxu0 0.0
    %712 = vmatpush1.msra.mxu0 0.0
    %713 = vmatprep.subr.mxu0 0.0
    %714 = vmatpush1.msra.mxu0 0.0
    %715 = vmatprep.subr.mxu0 0.0
    %716 = vmatpush1.msra.mxu0 0.0
    %717 = vmatprep.subr.mxu0 0.0
    %718 = vmatpush1.msra.mxu0 0.0
    %719 = vmatprep.subr.mxu0 0.0
    %720 = vmatpush1.msra.mxu0 0.0
    %721 = vmatprep.subr.mxu0 0.0
    %722 = vmatpush1.msra.mxu0 0.0
    %723 = vmatprep.subr.mxu0 0.0
    %724 = vmatpush1.msra.mxu0 0.0
    %725 = vmatprep.subr.mxu0 0.0
    %726 = vmatpush1.msra.mxu0 0.0
    %727 = vmatprep.subr.mxu0 0.0
    %728 = vmatpush1.msra.mxu0 0.0
    %729 = vmatprep.subr.mxu0 0.0
    %730 = vmatpush1.msra.mxu0 0.0
    %731 = vmatprep.subr.mxu0 0.0
    %732 = vmatpush1.msra.mxu0 0.0
    %733 = vmatprep.subr.mxu0 0.0
    %734 = vmatpush1.msra.mxu0 0.0
    %735 = vmatprep.subr.mxu0 0.0
    %736 = vmatpush1.msra.mxu0 0.0
    %737 = vmatprep.mubr.f32.mxu0 0.0
    %738 = vmatmul.mubr.f32.gmra.mrb[0].mxu0 %v647
    %v739 = vpop.f32.mrb[0].mxu0
    %v740 = vadd.f32 %v671, %v739
    %v741 = vpop.f32.mrb[0].mxu0
    %742 = vdwg.mxu0
    %v743 = vld [vmem:[%s7] sm:$0x1]
    %v745 = vlaneseq
    %v746 = vshrl.u32 %v745, 7
    %v747 = vsub.s32 0, %v746
    %v748 = vrot.slane %v743, %v747
    %v750 = vmul.f32 %v740, %v748
    %751 = vadd.xlane.f32.xlu0 %v750
    %v752 = vpop.xlane.xlu0 %751
    %s753 = sld [smem:[#allocation2]]
    %v754 = vstv %s753
    %v755 = vadd.f32 %v752, %v754
    %756 = vst [vmem:[%s9] sm:$0xff] %v755
    // Predicated region
    $region46: #{glow_model_forward.1} parent=1 // pred_check
      _
    $region47: #{glow_model_forward.1} parent=1 // pred_check_branch
      %758 = sbr.rel (0) target = $region49
    $region48: #{glow_model_forward.1} parent=1 // pred_region
      _
    $region49: #{glow_model_forward.1} parent=1 // pred_fallthru
      _
    // Predicated region
    $region50: #{glow_model_forward.1} parent=1 // pred_check
      _
    $region51: #{glow_model_forward.1} parent=1 // pred_check_branch
      %760 = sbr.rel (0) target = $region53
    $region52: #{glow_model_forward.1} parent=1 // pred_region
      _
    $region53: #{glow_model_forward.1} parent=1 // pred_fallthru
      _
    %761 = vsyncpa [#allocation4], 1
    %762 = vsyncpa [#allocation6], 1

</llo_original>
